<compile_context>
chip_gen: v7x
topology: tpu7x:2x2x1
jax: 0.10.0
libtpu: 0.0.40
codegen_flags: <defaults>
</compile_context>

<pallas_src>
import math
import functools

import jax
import jax.numpy as jnp
from jax.experimental import pallas as pl
from jax.experimental.pallas import tpu as pltpu


# ---------------------------------------------------------------------------
# Parameter construction (deterministic, matches PyTorch __init__ exactly)
# ---------------------------------------------------------------------------
def make_pos_embedding(emb_size: int, maxlen: int = 5000) -> jnp.ndarray:
    den = jnp.exp(-jnp.arange(0, emb_size, 2, dtype=jnp.float32)
                  * math.log(10000.0) / emb_size)                  # (emb/2,)
    pos = jnp.arange(0, maxlen, dtype=jnp.float32).reshape(maxlen, 1)
    pe = jnp.zeros((maxlen, emb_size), dtype=jnp.float32)
    pe = pe.at[:, 0::2].set(jnp.sin(pos * den))
    pe = pe.at[:, 1::2].set(jnp.cos(pos * den))
    return pe[:, None, :]                                           # (maxlen, 1, emb)


# ---------------------------------------------------------------------------
# Pallas kernels (2-D, lane-dense blocks)
# ---------------------------------------------------------------------------
def _pe_add_kernel(x_ref, pos_ref, o_ref, *, batch: int):
    # x_ref: (ts, B*E); pos_ref: (ts, E) -> tile across the batch along lanes.
    pos_b = jnp.tile(pos_ref[...], (1, batch))                      # (ts, B*E)
    o_ref[...] = (x_ref[...] + pos_b).astype(o_ref.dtype)


def _pe_add_dropout_kernel(x_ref, pos_ref, bits_ref, o_ref, *, batch: int, p: float):
    pos_b = jnp.tile(pos_ref[...], (1, batch))                      # (ts, B*E)
    y = x_ref[...] + pos_b
    # 32-bit threshold compare (no shift): drop iff bits < p * 2^32.
    thresh = jnp.uint32(min(int(p * 4294967296.0), 4294967295))
    keep = bits_ref[...] >= thresh
    scale = jnp.asarray(1.0 / (1.0 - p), dtype=y.dtype)
    o_ref[...] = jnp.where(keep, y * scale, jnp.zeros_like(y)).astype(o_ref.dtype)


# ---------------------------------------------------------------------------
# Tile-size selection: ~2 MiB per x block, sublane-aligned, prefer divisors of S
# ---------------------------------------------------------------------------
def _choose_seq_tile(seq: int, row_bytes: int, target_bytes: int = 2 << 20) -> int:
    if seq * row_bytes <= target_bytes:
        return seq                                                   # one full block
    ts = max(8, min(seq, target_bytes // max(row_bytes, 1)))
    ts = max(8, (int(ts) // 8) * 8)                                  # sublane multiple
    for cand in range(ts, 7, -8):                                    # prefer exact divisor
        if seq % cand == 0:
            return cand
    return ts                                                        # ragged tail handled by cdiv grid


# ---------------------------------------------------------------------------
# Wrapper
# ---------------------------------------------------------------------------
def positional_encoding(x, pos_embedding, *, dropout_p: float = 0.1,
                        training: bool = False, rng=None):
    """x: (S, B, E).  pos_embedding: (maxlen, 1, E) or (maxlen, E)."""
    S, B, E = x.shape
    BE = B * E

    pos2 = pos_embedding[:, 0, :] if pos_embedding.ndim == 3 else pos_embedding
    pos2 = pos2.astype(x.dtype)                                      # match dtype at boundary
    x2 = x.reshape(S, BE)                                            # free row-major reshape

    itemsize = jnp.dtype(x.dtype).itemsize
    ts = _choose_seq_tile(S, BE * itemsize)
    grid = (pl.cdiv(S, ts),)

    x_spec = pl.BlockSpec((ts, BE), lambda i: (i, 0))
    pos_spec = pl.BlockSpec((ts, E), lambda i: (i, 0))
    out_spec = pl.BlockSpec((ts, BE), lambda i: (i, 0))
    out_shape = jax.ShapeDtypeStruct((S, BE), x.dtype)

    cparams = pltpu.CompilerParams(dimension_semantics=("parallel",))

    use_dropout = training and dropout_p > 0.0
    bytes_accessed = (2 * S * BE + S * E) * itemsize + (S * BE * 4 if use_dropout else 0)
    cost = pl.CostEstimate(flops=S * BE * (3 if use_dropout else 1),
                           transcendentals=0,
                           bytes_accessed=bytes_accessed)

    if use_dropout:
        if rng is None:
            rng = jax.random.PRNGKey(0)
        bits = jax.random.bits(rng, (S, BE), dtype=jnp.uint32)
        kernel = functools.partial(_pe_add_dropout_kernel, batch=B, p=float(dropout_p))
        out2 = pl.pallas_call(
            kernel, out_shape=out_shape, grid=grid,
            in_specs=[x_spec, pos_spec, pl.BlockSpec((ts, BE), lambda i: (i, 0))],
            out_specs=out_spec,
            compiler_params=cparams, cost_estimate=cost,
        )(x2, pos2, bits)
    else:
        # eval-mode dropout == identity; plain fused broadcast-add kernel
        kernel = functools.partial(_pe_add_kernel, batch=B)
        out2 = pl.pallas_call(
            kernel, out_shape=out_shape, grid=grid,
            in_specs=[x_spec, pos_spec],
            out_specs=out_spec,
            compiler_params=cparams, cost_estimate=cost,
        )(x2, pos2)

    return out2.reshape(S, B, E)


# ---------------------------------------------------------------------------
# Demo / self-check
# ---------------------------------------------------------------------------
if __name__ == "__main__":
    SEQ, BATCH, EMB, MAXLEN = 8, 2, 32, 64
    DROPOUT = 0.1

    key = jax.random.PRNGKey(0)
    x = jax.random.normal(key, (SEQ, BATCH, EMB), dtype=jnp.float32)
    pos_emb = make_pos_embedding(EMB, MAXLEN)                        # (maxlen, 1, emb)

    # Eval-mode forward (deterministic; dropout acts as identity).
    out = positional_encoding(x, pos_emb, dropout_p=DROPOUT, training=False)
    out = jax.block_until_ready(out)

    ref = x + pos_emb[:SEQ]
    assert out.shape == (SEQ, BATCH, EMB)
    assert jnp.allclose(out, ref, atol=1e-6), "eval-mode mismatch vs reference"

    # Training-mode forward (dropout mask from portable jax.random bits).
    out_train = positional_encoding(x, pos_emb, dropout_p=DROPOUT, training=True,
                                    rng=jax.random.PRNGKey(123))
    out_train = jax.block_until_ready(out_train)
    assert out_train.shape == (SEQ, BATCH, EMB)
    # Each element is either dropped (0) or the kept value scaled by 1/(1-p).
    kept_ok = jnp.abs(out_train - ref * (1.0 / (1.0 - DROPOUT))) < 1e-5
    assert bool(jnp.all((out_train == 0) | kept_ok)), "training-mode dropout mismatch"
    # TODO(synk): the dropout mask will not bit-match torch.nn.Dropout's RNG
    # stream (statistics match; keep-prob and scaling are identical).

    print("KERNEL_OK")
</pallas_src>

<mosaic_0001>
module attributes {stable_mosaic.version = 11 : i64} {
  func.func @_pe_add_kernel(%arg0: i32, %arg1: memref<8x64xf32, #tpu.memory_space<vmem>>, %arg2: memref<8x32xf32, #tpu.memory_space<vmem>>, %arg3: memref<8x64xf32, #tpu.memory_space<vmem>>) attributes {dimension_semantics = [#tpu.dimension_semantics<parallel>], iteration_bounds = array<i64: 1>, scalar_prefetch = 0 : i64, scratch_operands = 0 : i64, tpu.core_type = #tpu.core_type<tc>, window_params = [{transform_indices = @transform_0, window_bounds = array<i64: 8, 64>}, {transform_indices = @transform_1, window_bounds = array<i64: 8, 32>}, {transform_indices = @transform_2, window_bounds = array<i64: 8, 64>}]} {
    %c0 = arith.constant 0 : index
    %c0_0 = arith.constant 0 : index
    %0 = vector.load %arg2[%c0, %c0_0] : memref<8x32xf32, #tpu.memory_space<vmem>>, vector<8x32xf32>
    %1 = tpu.concatenate %0, %0 in 1 : vector<8x32xf32>, vector<8x32xf32> -> vector<8x64xf32>
    %c0_1 = arith.constant 0 : index
    %c0_2 = arith.constant 0 : index
    %2 = vector.load %arg1[%c0_1, %c0_2] : memref<8x64xf32, #tpu.memory_space<vmem>>, vector<8x64xf32>
    %3 = arith.addf %2, %1 : vector<8x64xf32>
    %c0_3 = arith.constant 0 : index
    %c0_4 = arith.constant 0 : index
    %4 = vector.load %arg3[%c0_3, %c0_4] : memref<8x64xf32, #tpu.memory_space<vmem>>, vector<8x64xf32>
    tpu.vector_store %arg3[%c0_3, %c0_4], %3 {strides = array<i32>} : memref<8x64xf32, #tpu.memory_space<vmem>>, vector<8x64xf32>,
    return
  }
  func.func @transform_0(%arg0: i32) -> (i32, i32) {
    %c0_i32 = arith.constant 0 : i32
    %c0_i32_0 = arith.constant 0 : i32
    return %arg0, %c0_i32 : i32, i32
  }
  func.func @transform_1(%arg0: i32) -> (i32, i32) {
    %c0_i32 = arith.constant 0 : i32
    %c0_i32_0 = arith.constant 0 : i32
    return %arg0, %c0_i32 : i32, i32
  }
  func.func @transform_2(%arg0: i32) -> (i32, i32) {
    %c0_i32 = arith.constant 0 : i32
    %c0_i32_0 = arith.constant 0 : i32
    return %arg0, %c0_i32 : i32, i32
  }
}

</mosaic_0001>

<llo_original>
// kernel: tpu_custom_call.1
$region0: #{tpu_custom_call.1}
  #allocation0 [shape = 'u32[]', space=smem, size = 0x4, offset = 0x4, fixed_abs, tag = 'smem constant byte address 0x4 - core index']
  #allocation1 [shape = 'u32[144,128]{1,0:T(1,128)}', space=vmem, size = 0x12000, scoped, tag = 'internal scratch']
  %s0 = inlined_call_operand.vmem [shape: f32[8,64], index: 0, kind: input, shape index: {}]
  %s1 = inlined_call_operand.vmem [shape: f32[64,32], index: 1, kind: input, shape index: {}]
  %s2 = inlined_call_operand.hbm [shape: f32[8,64], index: 2, kind: output, shape index: {}]
  %s3 = sld [smem:[#allocation0]]
  $region18: #{tpu_custom_call.1} parent=0
    _
  %s5 = ssub.s32 1, %s3
  %s6 = scalar_select 0, %s5, %s3
  $region1: #{tpu_custom_call.1} parent=0
    #allocation2 [shape = 'u8[4096]{0}', space=vmem, size = 0x1000, scoped, tag = 'output window, operand 0, single buffered']
    #allocation3 [shape = 's32[1]{0}', space=sflag, size = 0x4, scoped, tag = 'scoped memory for tpu_custom_call.1']
    %7 = vsyncpa [#allocation3], 0
    // Predicated region
    $region2: #{tpu_custom_call.1} parent=1 // pred_check
      _
    $region3: #{tpu_custom_call.1} parent=1 // pred_check_branch
      %9 = sbr.rel (0) target = $region5
    $region4: #{tpu_custom_call.1} parent=1 // pred_region
      _
    $region5: #{tpu_custom_call.1} parent=1 // pred_fallthru
      _
    // Predicated region
    $region6: #{tpu_custom_call.1} parent=1 // pred_check
      _
    $region7: #{tpu_custom_call.1} parent=1 // pred_check_branch
      %11 = sbr.rel (0) target = $region9
    $region8: #{tpu_custom_call.1} parent=1 // pred_region
      _
    $region9: #{tpu_custom_call.1} parent=1 // pred_fallthru
      _
    %v12 = vld [vmem:[%s1] sm:$0xff]
    %14 = vrot.lane.b32.xlu0 %v12, 32
    %v15 = vpop.permute.xlu0 %14
    %vm17 = vcmask 261120
    %v18 = vsel %vm17, %v12, %v15
    %v19 = vld [vmem:[%s0] sm:$0xff]
    %v20 = vadd.f32 %v19, %v18
    %vm21 = vcmask 523264
    %22 = vst.msk [vmem:[#allocation2] sm:$0xff] %vm21, %v20
    // Predicated region
    $region10: #{tpu_custom_call.1} parent=1 // pred_check
      _
    $region11: #{tpu_custom_call.1} parent=1 // pred_check_branch
      %24 = sbr.rel (0) target = $region13
    $region12: #{tpu_custom_call.1} parent=1 // pred_region
      %s26 = ssub.s32 128, 128
      %27 = vsyncadd [#allocation3], %s26
      %s29 = sshll.u32 [#allocation2], 4
      %s30 = int_to_ptr.vmem [resolvable:$true] %s29
      %32 = dma.vmem_to_hbm [thread:$0]  %s30, 128, %s2, [#allocation3]
    $region13: #{tpu_custom_call.1} parent=1 // pred_fallthru
      _
    // Predicated region
    $region14: #{tpu_custom_call.1} parent=1 // pred_check
      _
    $region15: #{tpu_custom_call.1} parent=1 // pred_check_branch
      %34 = sbr.rel (0) target = $region17
    $region16: #{tpu_custom_call.1} parent=1 // pred_region
      %35 = dma.done [#allocation3], 128
    $region17: #{tpu_custom_call.1} parent=1 // pred_fallthru
      _
    %36 = vsyncpa [#allocation3], 1

</llo_original>
